<compile_context>
chip_gen: v6e
topology: v6e:2x2x1
jax: 0.10.0
libtpu: 0.0.40
codegen_flags: <defaults>
</compile_context>

<pallas_src>
import jax
import jax.numpy as jnp
from jax.experimental import pallas as pl
from jax.experimental.pallas import tpu as pltpu  # noqa: F401


def _fused_double_dropout_kernel(x_ref, bits_ref, o_ref):
    """out = dropout(dropout(x, 0.5), 0.5)  ==  keep-prob 0.25, scale 4."""
    x = x_ref[...].astype(jnp.float32)
    bits = bits_ref[...]  # uint32 uniform random words, one per element

    # Two independent Bernoulli(0.5) "keep" bits from a single random word:
    # keep the element iff bit 31 AND bit 0 are both set  (prob = 0.25).
    both = jnp.uint32(0x80000001)
    keep = (bits & both) == both

    o_ref[...] = jnp.where(keep, x * jnp.float32(4.0),
                           jnp.float32(0.0)).astype(o_ref.dtype)


def m1_forward(x, key=None):
    """JAX/Pallas equivalent of m1.forward (training-mode dropout twice).

    TODO(synk): `x4 = self.m2(x2)` — m2 is an unspecified submodule that is
    never assigned in __init__ and whose result is unused; it is omitted.
    """
    if key is None:
        key = jax.random.PRNGKey(0)

    orig_shape = x.shape
    n = x.size

    # Pure view change, no padding / scatter / slicing.
    x2 = x.reshape(1, n)
    bits = jax.random.bits(key, (1, n), dtype=jnp.uint32)

    out = pl.pallas_call(
        _fused_double_dropout_kernel,
        out_shape=jax.ShapeDtypeStruct(x2.shape, x2.dtype),
    )(x2, bits)

    return out.reshape(orig_shape)


if __name__ == "__main__":
    key = jax.random.PRNGKey(0)
    kx, kd = jax.random.split(key)

    # Same shape as the reference program: x1 = torch.randn(1, 2, 2)
    x1 = jax.random.normal(kx, (1, 2, 2), dtype=jnp.float32)

    out = m1_forward(x1, key=kd)
    out = jax.block_until_ready(out)

    assert out.shape == (1, 2, 2)
    assert out.dtype == jnp.float32
    # Each output element must be either 0 or exactly 4 * x (double dropout).
    ok = jnp.all(jnp.isclose(out, 0.0) | jnp.isclose(out, 4.0 * x1))
    assert bool(ok)
    print("KERNEL_OK")
</pallas_src>

<mosaic_0001>
module attributes {stable_mosaic.version = 11 : i64} {
  func.func @_fused_double_dropout_kernel(%arg0: memref<1x4xf32, #tpu.memory_space<vmem>>, %arg1: memref<1x4xi32, #tpu.memory_space<vmem>>, %arg2: memref<1x4xf32, #tpu.memory_space<vmem>>) attributes {dimension_semantics = [], scalar_prefetch = 0 : i64, scratch_operands = 0 : i64, tpu.core_type = #tpu.core_type<tc>} {
    %c0 = arith.constant 0 : index
    %c0_0 = arith.constant 0 : index
    %0 = vector.load %arg0[%c0, %c0_0] : memref<1x4xf32, #tpu.memory_space<vmem>>, vector<1x4xf32>
    %c0_1 = arith.constant 0 : index
    %c0_2 = arith.constant 0 : index
    %1 = vector.load %arg1[%c0_1, %c0_2] : memref<1x4xi32, #tpu.memory_space<vmem>>, vector<1x4xi32>
    %c-2147483647_i32 = arith.constant -2147483647 : i32
    %2 = vector.broadcast %c-2147483647_i32 : i32 to vector<1x4xi32>
    %3 = arith.andi %1, %2 : vector<1x4xi32>
    %c-2147483647_i32_3 = arith.constant -2147483647 : i32
    %4 = vector.broadcast %c-2147483647_i32_3 : i32 to vector<1x4xi32>
    %5 = arith.cmpi eq, %3, %4 : vector<1x4xi32>
    %cst = arith.constant 4.000000e+00 : f32
    %6 = vector.broadcast %cst : f32 to vector<1x4xf32>
    %7 = arith.mulf %0, %6 : vector<1x4xf32>
    %cst_4 = arith.constant 0.000000e+00 : f32
    %8 = vector.broadcast %cst_4 : f32 to vector<1x4xf32>
    %9 = arith.select %5, %7, %8 : vector<1x4xi1>, vector<1x4xf32>
    %c0_5 = arith.constant 0 : index
    %c0_6 = arith.constant 0 : index
    %10 = vector.load %arg2[%c0_5, %c0_6] : memref<1x4xf32, #tpu.memory_space<vmem>>, vector<1x4xf32>
    tpu.vector_store %arg2[%c0_5, %c0_6], %9 {strides = array<i32>} : memref<1x4xf32, #tpu.memory_space<vmem>>, vector<1x4xf32>,
    return
  }
}

</mosaic_0001>

<llo_original>
// kernel: tpu_custom_call.1
$region0: #{tpu_custom_call.1}
  #allocation0 [shape = 'u32[]', space=smem, size = 0x4, offset = 0x4, fixed_abs, tag = 'smem constant byte address 0x4 - core index']
  #allocation1 [shape = 'u32[144,128]{1,0:T(1,128)}', space=vmem, size = 0x12000, scoped, tag = 'internal scratch']
  %s0 = inlined_call_operand.hbm [shape: f32[1,4], index: 0, kind: input, shape index: {}]
  %s1 = inlined_call_operand.vmem [shape: u32[1,4], index: 1, kind: input, shape index: {}]
  %s2 = inlined_call_operand.hbm [shape: f32[1,4], index: 2, kind: output, shape index: {}]
  %s3 = sld [smem:[#allocation0]]
  $region22: #{tpu_custom_call.1} parent=0
    _
  %s5 = ssub.s32 1, %s3
  %s6 = scalar_select 0, %s5, %s3
  $region1: #{tpu_custom_call.1} parent=0
    #allocation2 [shape = 'u8[512]{0}', space=vmem, size = 0x400, scoped, tag = 'input window, operand 0, single buffered']
    #allocation3 [shape = 's32[1]{0}', space=sflag, size = 0x4, scoped, tag = 'scoped memory for tpu_custom_call.1']
    #allocation4 [shape = 's32[1]{0}', space=sflag, size = 0x4, scoped, tag = 'scoped memory for tpu_custom_call.1']
    #allocation5 [shape = 'u8[512]{0}', space=vmem, size = 0x400, scoped, tag = 'output window, operand 0, single buffered']
    %7 = vsyncpa [#allocation3], 0
    %8 = vsyncpa [#allocation4], 0
    // Predicated region
    $region2: #{tpu_custom_call.1} parent=1 // pred_check
      _
    $region3: #{tpu_custom_call.1} parent=1 // pred_check_branch
      %10 = sbr.rel (0) target = $region5
    $region4: #{tpu_custom_call.1} parent=1 // pred_region
      %s12 = ssub.s32 16, 16
      %13 = vsyncadd [#allocation3], %s12
      %s15 = sshll.u32 [#allocation2], 4
      %s16 = int_to_ptr.vmem [resolvable:$true] %s15
      %18 = dma.hbm_to_vmem [thread:$0]  %s0, 16, %s16, [#allocation3]
    $region5: #{tpu_custom_call.1} parent=1 // pred_fallthru
      _
    // Predicated region
    $region6: #{tpu_custom_call.1} parent=1 // pred_check
      _
    $region7: #{tpu_custom_call.1} parent=1 // pred_check_branch
      %20 = sbr.rel (0) target = $region9
    $region8: #{tpu_custom_call.1} parent=1 // pred_region
      _
    $region9: #{tpu_custom_call.1} parent=1 // pred_fallthru
      _
    // Predicated region
    $region10: #{tpu_custom_call.1} parent=1 // pred_check
      _
    $region11: #{tpu_custom_call.1} parent=1 // pred_check_branch
      %22 = sbr.rel (0) target = $region13
    $region12: #{tpu_custom_call.1} parent=1 // pred_region
      %23 = dma.done [#allocation3], 16
    $region13: #{tpu_custom_call.1} parent=1 // pred_fallthru
      _
    %v24 = vld [vmem:[#allocation2] sm:$0x1]
    %v25 = vld [vmem:[%s1] sm:$0x1]
    %v26 = vand.u32 %v25, 2147483649
    %vm27 = vcmp.eq.s32.totalorder %v26, 2147483649
    %v28 = vmul.f32 %v24, 4.0
    %v29 = vsel %vm27, %v28, 0.0
    %vm30 = vcmask 24576
    %31 = vst.msk [vmem:[#allocation5] sm:$0x1] %vm30, %v29
    // Predicated region
    $region14: #{tpu_custom_call.1} parent=1 // pred_check
      _
    $region15: #{tpu_custom_call.1} parent=1 // pred_check_branch
      %33 = sbr.rel (0) target = $region17
    $region16: #{tpu_custom_call.1} parent=1 // pred_region
      %s35 = ssub.s32 16, 16
      %36 = vsyncadd [#allocation4], %s35
      %s38 = sshll.u32 [#allocation5], 4
      %s39 = int_to_ptr.vmem [resolvable:$true] %s38
      %41 = dma.vmem_to_hbm [thread:$0]  %s39, 16, %s2, [#allocation4]
    $region17: #{tpu_custom_call.1} parent=1 // pred_fallthru
      _
    // Predicated region
    $region18: #{tpu_custom_call.1} parent=1 // pred_check
      _
    $region19: #{tpu_custom_call.1} parent=1 // pred_check_branch
      %43 = sbr.rel (0) target = $region21
    $region20: #{tpu_custom_call.1} parent=1 // pred_region
      %44 = dma.done [#allocation4], 16
    $region21: #{tpu_custom_call.1} parent=1 // pred_fallthru
      _
    %45 = vsyncpa [#allocation3], 1
    %46 = vsyncpa [#allocation4], 1

</llo_original>
